<compile_context>
chip_gen: v7x
topology: tpu7x:2x2x1
jax: 0.10.0
libtpu: 0.0.40
codegen_flags: <defaults>
</compile_context>

<pallas_src>
import math

import jax
import jax.numpy as jnp
from jax.experimental import pallas as pl
from jax.experimental.pallas import tpu as pltpu

_LANES = 128
_TARGET_BLOCK_BYTES = 2 * 1024 * 1024          # ~2 MiB per input block
_VMEM_LIMIT_BYTES = 32 * 1024 * 1024           # safe on v5e/v6e/v7x


# ---------------------------------------------------------------------------
# Kernels
# ---------------------------------------------------------------------------
def _mse_elem_kernel(a_ref, b_ref, o_ref):
    d = a_ref[...] - b_ref[...]
    o_ref[...] = d * d


def _mse_partial_sum_kernel(a_ref, b_ref, o_ref):
    # Per-block partial sum, kept lane-dense as an (1, 8, 128) f32 tile.
    d = (a_ref[...] - b_ref[...]).astype(jnp.float32)
    d2 = d * d
    # (row_tile, 128) -> (row_tile//8, 8, 128); reduce over leading axis is
    # pure vreg adds (VPU), no cross-lane XLU work per step.
    o_ref[...] = d2.reshape(-1, 8, _LANES).sum(axis=0, keepdims=True)


# ---------------------------------------------------------------------------
# Tiling helpers
# ---------------------------------------------------------------------------
def _choose_tiling(n_elems, itemsize):
    """Return (padded_rows, row_tile) for a (rows, 128) slab."""
    sublane = max(8, 32 // int(itemsize))            # 8 f32, 16 bf16, 32 int8
    rows = -(-n_elems // _LANES)                     # ceil
    rows = ((rows + sublane - 1) // sublane) * sublane
    target_rows = max(sublane,
                      (_TARGET_BLOCK_BYTES // (_LANES * int(itemsize)))
                      // sublane * sublane)
    if rows <= target_rows:
        return rows, rows                            # single block, one step
    grid = -(-rows // target_rows)
    row_tile = -(-rows // grid)
    row_tile = ((row_tile + sublane - 1) // sublane) * sublane
    return grid * row_tile, row_tile


def _to_slab(x, padded_rows):
    """Flatten to (padded_rows, 128); pads only when strictly required."""
    flat = x.reshape(-1)
    padded_n = padded_rows * _LANES
    if padded_n != flat.shape[0]:
        flat = jnp.pad(flat, (0, padded_n - flat.shape[0]))
    return flat.reshape(padded_rows, _LANES)


# ---------------------------------------------------------------------------
# Wrapper
# ---------------------------------------------------------------------------
def mse(x1, x2, size_average=False):
    """Pallas implementation of MSE.forward (any shape; elementwise)."""
    out_dtype = jnp.result_type(x1.dtype, x2.dtype)
    if x1.shape != x2.shape:
        x1, x2 = jnp.broadcast_arrays(x1, x2)
    out_shape = x1.shape
    if x1.dtype != out_dtype:
        x1 = x1.astype(out_dtype)
    if x2.dtype != out_dtype:
        x2 = x2.astype(out_dtype)

    n_elems = math.prod(out_shape)
    if n_elems == 0:
        if size_average:
            return jnp.float32(jnp.nan)
        return jnp.zeros(out_shape, out_dtype)

    itemsize = jnp.dtype(out_dtype).itemsize
    padded_rows, row_tile = _choose_tiling(n_elems, itemsize)
    grid_n = padded_rows // row_tile

    a2d = _to_slab(x1, padded_rows)
    b2d = _to_slab(x2, padded_rows)

    in_spec = pl.BlockSpec((row_tile, _LANES), lambda i: (i, 0))

    if not size_average:
        out2d = pl.pallas_call(
            _mse_elem_kernel,
            out_shape=jax.ShapeDtypeStruct((padded_rows, _LANES), out_dtype),
            grid_spec=pltpu.PrefetchScalarGridSpec(
                num_scalar_prefetch=0,
                grid=(grid_n,),
                in_specs=[in_spec, in_spec],
                out_specs=pl.BlockSpec((row_tile, _LANES), lambda i: (i, 0)),
            ),
            compiler_params=pltpu.CompilerParams(
                dimension_semantics=("parallel",),
                vmem_limit_bytes=_VMEM_LIMIT_BYTES,
            ),
        )(a2d, b2d)
        if padded_rows * _LANES == n_elems:
            return out2d.reshape(out_shape)
        return out2d.reshape(-1)[:n_elems].reshape(out_shape)

    # size_average=True: parallel per-block partial sums, tiny final reduce in
    # JAX (padded zeros contribute 0; inv_n uses the true element count).
    partials = pl.pallas_call(
        _mse_partial_sum_kernel,
        out_shape=jax.ShapeDtypeStruct((grid_n, 8, _LANES), jnp.float32),
        grid_spec=pltpu.PrefetchScalarGridSpec(
            num_scalar_prefetch=0,
            grid=(grid_n,),
            in_specs=[in_spec, in_spec],
            out_specs=pl.BlockSpec((1, 8, _LANES), lambda i: (i, 0, 0)),
        ),
        compiler_params=pltpu.CompilerParams(
            dimension_semantics=("parallel",),
            vmem_limit_bytes=_VMEM_LIMIT_BYTES,
        ),
    )(a2d, b2d)
    return jnp.sum(partials) * (1.0 / float(n_elems))


# ---------------------------------------------------------------------------
# Demo / self-check
# ---------------------------------------------------------------------------
if __name__ == "__main__":
    key = jax.random.PRNGKey(0)
    k1, k2 = jax.random.split(key)
    # NCHW, small shapes
    x1 = jax.random.normal(k1, (2, 4, 16, 16), dtype=jnp.float32)
    x2 = jax.random.normal(k2, (2, 4, 16, 16), dtype=jnp.float32)

    # size_average=False (module default): elementwise (x1 - x2)^2
    out = mse(x1, x2, size_average=False)
    out = jax.block_until_ready(out)
    ref = (x1 - x2) ** 2
    assert out.shape == ref.shape and out.dtype == ref.dtype
    assert jnp.allclose(out, ref, atol=1e-6, rtol=1e-6)

    # size_average=True: scalar mean (in-kernel partial sums + tiny JAX reduce)
    out_mean = jax.block_until_ready(mse(x1, x2, size_average=True))
    assert jnp.allclose(out_mean, jnp.mean(ref), atol=1e-5, rtol=1e-5)

    # Also exercise a ragged / multi-block size (forces padding + >1 grid step)
    y1 = jax.random.normal(k1, (3, 5, 37, 29), dtype=jnp.float32)
    y2 = jax.random.normal(k2, (3, 5, 37, 29), dtype=jnp.float32)
    out2 = jax.block_until_ready(mse(y1, y2, size_average=False))
    ref2 = (y1 - y2) ** 2
    assert jnp.allclose(out2, ref2, atol=1e-6, rtol=1e-6)
    mean2 = jax.block_until_ready(mse(y1, y2, size_average=True))
    assert jnp.allclose(mean2, jnp.mean(ref2), atol=1e-5, rtol=1e-5)

    print("KERNEL_OK")
</pallas_src>

<mosaic_0001>
module attributes {stable_mosaic.version = 11 : i64} {
  func.func @_mse_elem_kernel(%arg0: i32, %arg1: memref<16x128xf32, #tpu.memory_space<vmem>>, %arg2: memref<16x128xf32, #tpu.memory_space<vmem>>, %arg3: memref<16x128xf32, #tpu.memory_space<vmem>>) attributes {dimension_semantics = [#tpu.dimension_semantics<parallel>], iteration_bounds = array<i64: 1>, scalar_prefetch = 0 : i64, scratch_operands = 0 : i64, tpu.core_type = #tpu.core_type<tc>, window_params = [{transform_indices = @transform_0, window_bounds = array<i64: 16, 128>}, {transform_indices = @transform_1, window_bounds = array<i64: 16, 128>}, {transform_indices = @transform_2, window_bounds = array<i64: 16, 128>}]} {
    %c0 = arith.constant 0 : index
    %c0_0 = arith.constant 0 : index
    %0 = vector.load %arg1[%c0, %c0_0] : memref<16x128xf32, #tpu.memory_space<vmem>>, vector<16x128xf32>
    %c0_1 = arith.constant 0 : index
    %c0_2 = arith.constant 0 : index
    %1 = vector.load %arg2[%c0_1, %c0_2] : memref<16x128xf32, #tpu.memory_space<vmem>>, vector<16x128xf32>
    %2 = arith.subf %0, %1 : vector<16x128xf32>
    %3 = arith.mulf %2, %2 : vector<16x128xf32>
    %c0_3 = arith.constant 0 : index
    %c0_4 = arith.constant 0 : index
    %4 = vector.load %arg3[%c0_3, %c0_4] : memref<16x128xf32, #tpu.memory_space<vmem>>, vector<16x128xf32>
    tpu.vector_store %arg3[%c0_3, %c0_4], %3 {strides = array<i32>} : memref<16x128xf32, #tpu.memory_space<vmem>>, vector<16x128xf32>,
    return
  }
  func.func @transform_0(%arg0: i32) -> (i32, i32) {
    %c0_i32 = arith.constant 0 : i32
    %c0_i32_0 = arith.constant 0 : i32
    return %arg0, %c0_i32 : i32, i32
  }
  func.func @transform_1(%arg0: i32) -> (i32, i32) {
    %c0_i32 = arith.constant 0 : i32
    %c0_i32_0 = arith.constant 0 : i32
    return %arg0, %c0_i32 : i32, i32
  }
  func.func @transform_2(%arg0: i32) -> (i32, i32) {
    %c0_i32 = arith.constant 0 : i32
    %c0_i32_0 = arith.constant 0 : i32
    return %arg0, %c0_i32 : i32, i32
  }
}

</mosaic_0001>

<llo_original>
// kernel: tpu_custom_call.1
$region0: #{tpu_custom_call.1}
  #allocation0 [shape = 'u32[]', space=smem, size = 0x4, offset = 0x4, fixed_abs, tag = 'smem constant byte address 0x4 - core index']
  #allocation1 [shape = 'u32[144,128]{1,0:T(1,128)}', space=vmem, size = 0x12000, scoped, tag = 'internal scratch']
  %s0 = inlined_call_operand.hbm [shape: f32[16,128], index: 0, kind: input, shape index: {}]
  %s1 = inlined_call_operand.hbm [shape: f32[16,128], index: 1, kind: input, shape index: {}]
  %s2 = inlined_call_operand.hbm [shape: f32[16,128], index: 2, kind: output, shape index: {}]
  %s3 = sld [smem:[#allocation0]]
  $region26: #{tpu_custom_call.1} parent=0
    _
  %s5 = ssub.s32 1, %s3
  %s6 = scalar_select 0, %s5, %s3
  $region1: #{tpu_custom_call.1} parent=0
    #allocation2 [shape = 'u8[8192]{0}', space=vmem, size = 0x2000, scoped, tag = 'input window, operand 0, single buffered']
    #allocation3 [shape = 's32[1]{0}', space=sflag, size = 0x4, scoped, tag = 'scoped memory for tpu_custom_call.1']
    #allocation4 [shape = 's32[1]{0}', space=sflag, size = 0x4, scoped, tag = 'scoped memory for tpu_custom_call.1']
    #allocation5 [shape = 'u8[8192]{0}', space=vmem, size = 0x2000, scoped, tag = 'input window, operand 1, single buffered']
    #allocation6 [shape = 's32[1]{0}', space=sflag, size = 0x4, scoped, tag = 'scoped memory for tpu_custom_call.1']
    #allocation7 [shape = 'u8[8192]{0}', space=vmem, size = 0x2000, scoped, tag = 'output window, operand 0, single buffered']
    %7 = vsyncpa [#allocation3], 0
    %8 = vsyncpa [#allocation6], 0
    %9 = vsyncpa [#allocation4], 0
    // Predicated region
    $region2: #{tpu_custom_call.1} parent=1 // pred_check
      _
    $region3: #{tpu_custom_call.1} parent=1 // pred_check_branch
      %11 = sbr.rel (0) target = $region5
    $region4: #{tpu_custom_call.1} parent=1 // pred_region
      %s13 = ssub.s32 256, 256
      %14 = vsyncadd [#allocation3], %s13
      %s15 = sshll.u32 [#allocation2], 4
      %s16 = int_to_ptr.vmem [resolvable:$true] %s15
      %21 = dma.hbm_to_vmem [thread:$0]  %s0, 256, %s16, [#allocation3], 128, 128, 8
    $region5: #{tpu_custom_call.1} parent=1 // pred_fallthru
      _
    // Predicated region
    $region6: #{tpu_custom_call.1} parent=1 // pred_check
      _
    $region7: #{tpu_custom_call.1} parent=1 // pred_check_branch
      %23 = sbr.rel (0) target = $region9
    $region8: #{tpu_custom_call.1} parent=1 // pred_region
      %s25 = ssub.s32 256, 256
      %26 = vsyncadd [#allocation6], %s25
      %s27 = sshll.u32 [#allocation5], 4
      %s28 = int_to_ptr.vmem [resolvable:$true] %s27
      %33 = dma.hbm_to_vmem [thread:$0]  %s1, 256, %s28, [#allocation6], 128, 128, 8
    $region9: #{tpu_custom_call.1} parent=1 // pred_fallthru
      _
    // Predicated region
    $region10: #{tpu_custom_call.1} parent=1 // pred_check
      _
    $region11: #{tpu_custom_call.1} parent=1 // pred_check_branch
      %35 = sbr.rel (0) target = $region13
    $region12: #{tpu_custom_call.1} parent=1 // pred_region
      %36 = dma.done [#allocation3], 256
    $region13: #{tpu_custom_call.1} parent=1 // pred_fallthru
      _
    // Predicated region
    $region14: #{tpu_custom_call.1} parent=1 // pred_check
      _
    $region15: #{tpu_custom_call.1} parent=1 // pred_check_branch
      %38 = sbr.rel (0) target = $region17
    $region16: #{tpu_custom_call.1} parent=1 // pred_region
      %39 = dma.done [#allocation6], 256
    $region17: #{tpu_custom_call.1} parent=1 // pred_fallthru
      _
    %v40 = vld [vmem:[#allocation2] sm:$0xff]
    %v41 = vld [vmem:[#allocation2 + $0x8] sm:$0xff]
    %v42 = vld [vmem:[#allocation5] sm:$0xff]
    %v43 = vld [vmem:[#allocation5 + $0x8] sm:$0xff]
    %v44 = vsub.f32 %v40, %v42
    %v45 = vsub.f32 %v41, %v43
    %v46 = vmul.f32 %v44, %v44
    %v47 = vmul.f32 %v45, %v45
    %48 = vst [vmem:[#allocation7] sm:$0xff] %v46
    %49 = vst [vmem:[#allocation7 + $0x8] sm:$0xff] %v47
    // Predicated region
    $region18: #{tpu_custom_call.1} parent=1 // pred_check
      _
    $region19: #{tpu_custom_call.1} parent=1 // pred_check_branch
      %51 = sbr.rel (0) target = $region21
    $region20: #{tpu_custom_call.1} parent=1 // pred_region
      %s53 = ssub.s32 256, 256
      %54 = vsyncadd [#allocation4], %s53
      %s55 = sshll.u32 [#allocation7], 4
      %s56 = int_to_ptr.vmem [resolvable:$true] %s55
      %61 = dma.vmem_to_hbm [thread:$0]  %s56, 256, %s2, [#allocation4], 128, 128, 8
    $region21: #{tpu_custom_call.1} parent=1 // pred_fallthru
      _
    // Predicated region
    $region22: #{tpu_custom_call.1} parent=1 // pred_check
      _
    $region23: #{tpu_custom_call.1} parent=1 // pred_check_branch
      %63 = sbr.rel (0) target = $region25
    $region24: #{tpu_custom_call.1} parent=1 // pred_region
      %64 = dma.done [#allocation4], 256
    $region25: #{tpu_custom_call.1} parent=1 // pred_fallthru
      _
    %65 = vsyncpa [#allocation3], 1
    %66 = vsyncpa [#allocation6], 1
    %67 = vsyncpa [#allocation4], 1

</llo_original>
